<compile_context>
chip_gen: v5e
topology: v5e:2x2
jax: 0.10.0
libtpu: 0.0.40
codegen_flags: <defaults>
</compile_context>

<pallas_src>
import jax
import jax.numpy as jnp
from jax.experimental import pallas as pl
from jax.experimental.pallas import tpu as pltpu

HIDDEN = 32            # config['hidden_size']
NUM_FRAMES = 8         # small example (gridless path)
NUM_FRAMES_BIG = 1700  # batched example (tiled grid path + padded tail, not a multiple of 128)

_LANE = 128            # lane width: frame-tile widths are multiples of this
_GRIDLESS_MAX = 1024   # frames at/below this -> single VMEM-resident block (no grid)
_TM_TARGET = 512       # target frame-tile width (columns) for the grid path


def _cdiv(a, b):
    return -(-a // b)


def _round_up(x, m):
    return _cdiv(x, m) * m


# ---------------------------------------------------------------------------
# Kernels (feature-major: blocks are [H, TM], frames along lanes)
# ---------------------------------------------------------------------------
def _tensor_path_kernel(kw_ref, x_ref, w_ref, b_ref, waf_ref, o_ref):
    """Tensor-keyword path: representation MLP -> attention gate -> dense."""
    f32 = jnp.float32
    bf16 = jnp.bfloat16
    x = x_ref[...].astype(bf16)                                            # [H, TM]
    # param['representation']: Linear+ReLU, Linear+ReLU (Dropout = identity in eval).
    h = jnp.maximum(
        jnp.dot(w_ref[0], x, preferred_element_type=f32) + b_ref[:, 0:1], 0.0)
    h = jnp.maximum(
        jnp.dot(w_ref[1], h.astype(bf16), preferred_element_type=f32) + b_ref[:, 1:2], 0.0)
    hb = h.astype(bf16)
    # attention(cat([h, kw])) = sigmoid(waf @ h + (wak . kw + ba));
    # the keyword term is a scalar precomputed per forward and passed via SMEM.
    logit = jnp.dot(waf_ref[...], hb, preferred_element_type=f32)          # [1, TM]
    score = jax.nn.sigmoid(logit + kw_ref[0, 0])                           # [1, TM]
    agg = (score * h).astype(bf16)                                         # [H, TM] sublane-bcast mul
    # dense: Linear + ReLU (Dropout = identity).
    out = jnp.dot(w_ref[2], agg, preferred_element_type=f32) + b_ref[:, 2:3]
    o_ref[...] = jnp.maximum(out, 0.0).astype(o_ref.dtype)


def _keyword_path_kernel(x_ref, w_ref, b_ref, o_ref):
    """String-keyword path: param[keyword] MLP -> dense (no attention gate)."""
    f32 = jnp.float32
    bf16 = jnp.bfloat16
    x = x_ref[...].astype(bf16)                                            # [H, TM]
    h = jnp.maximum(
        jnp.dot(w_ref[0], x, preferred_element_type=f32) + b_ref[:, 0:1], 0.0)
    h = jnp.maximum(
        jnp.dot(w_ref[1], h.astype(bf16), preferred_element_type=f32) + b_ref[:, 1:2], 0.0)
    out = jnp.dot(w_ref[2], h.astype(bf16), preferred_element_type=f32) + b_ref[:, 2:3]
    o_ref[...] = jnp.maximum(out, 0.0).astype(o_ref.dtype)


# ---------------------------------------------------------------------------
# Tiling plan + launch helper
# ---------------------------------------------------------------------------
def _tile_plan(F):
    """Return (F_pad, tm). tm is None for the single-block (gridless) path."""
    if F <= _GRIDLESS_MAX:
        # Single VMEM-resident block; pad frames to a lane multiple for full-width stores.
        return _round_up(F, _LANE), None
    tiles = _cdiv(F, _TM_TARGET)
    tiles += tiles % 2                       # even #tiles -> both v7x TensorCores get work
    tm = _round_up(_cdiv(F, tiles), _LANE)   # multiple of 128 -> unmasked lane-dense stores
    return tm * tiles, tm


def _launch(kernel, featT, tm, vmem_ops, smem_ops=()):
    H, F_pad = featT.shape
    out_shape = jax.ShapeDtypeStruct((H, F_pad), featT.dtype)
    smem_spec = pl.BlockSpec(memory_space=pltpu.MemorySpace.SMEM)

    if tm is None:
        # Small path: no grid; everything VMEM-resident (KiB-scale).
        vmem_spec = pl.BlockSpec(memory_space=pltpu.MemorySpace.VMEM)
        return pl.pallas_call(
            kernel,
            out_shape=out_shape,
            in_specs=[smem_spec] * len(smem_ops) + [vmem_spec] * (1 + len(vmem_ops)),
            out_specs=vmem_spec,
        )(*smem_ops, featT, *vmem_ops)

    # Batched path: 1-D grid over lane-dense [H, tm] frame tiles. Weights/bias packs
    # are broadcast (full-array blocks, constant index -> not re-fetched per step).
    def _bcast(a):
        nd = a.ndim
        return pl.BlockSpec(a.shape, lambda i, _nd=nd: (0,) * _nd)

    in_specs = [smem_spec] * len(smem_ops)
    in_specs.append(pl.BlockSpec((H, tm), lambda i: (0, i)))
    in_specs += [_bcast(a) for a in vmem_ops]
    out_specs = pl.BlockSpec((H, tm), lambda i: (0, i))

    return pl.pallas_call(
        kernel,
        out_shape=out_shape,
        grid=(F_pad // tm,),
        in_specs=in_specs,
        out_specs=out_specs,
        compiler_params=pltpu.CompilerParams(
            dimension_semantics=("parallel",)),   # shards across v7x's 2 TCs; no-op on v5e/v6e
    )(*smem_ops, featT, *vmem_ops)


# ---------------------------------------------------------------------------
# Wrapper + parameter preparation
# ---------------------------------------------------------------------------
def filter_frame_forward(feat, keyword, params):
    """feat: [F, H]; keyword: [H] array or one of {'representation','relations','actions'}."""
    F, H = feat.shape
    F_pad, tm = _tile_plan(F)
    # Feature-major, lane-padded view of feat (layout plumbing, done once per forward).
    featT = jnp.pad(feat.T, ((0, 0), (0, F_pad - F)))

    if isinstance(keyword, str):
        w_pack, b_pack = params["packs"][keyword]
        outT = _launch(_keyword_path_kernel, featT, tm, (w_pack, b_pack))
    else:
        w_pack, b_pack = params["packs"]["representation"]
        waf, wak, ba = params["attention"]
        # Keyword half of the attention Linear collapses to one scalar; computed once
        # per forward (not per grid step) and passed through SMEM.
        kw_term = (jnp.dot(wak, keyword.astype(wak.dtype)) + ba).reshape(1, 1).astype(jnp.float32)
        outT = _launch(_tensor_path_kernel, featT, tm, (w_pack, b_pack, waf), (kw_term,))

    return outT[:, :F].T


def prepare_params(torch_params, hidden):
    """One-time (load-time) conversion from torch nn.Linear layout to kernel layout.

    torch layout : W [out, in], b [out]; attention W [1, 2H], b [1].
    kernel layout (feature-major, y = W @ x + b[:, None]):
      * W stays [out, in], cast to bf16, stacked with the shared dense weight into
        one [3, H, H] pack per keyword (W1 | W2 | W_dense).
      * biases stacked as columns of one [H, 4] f32 pack (b1 | b2 | b_dense | 0).
      * attention split: feat half as a [1, H] bf16 row; keyword half + bias kept
        f32 for the tiny per-call scalar precompute.
    """
    H = hidden
    wd, bd = torch_params["dense"]
    packs = {}
    for kw, ((w1, b1), (w2, b2)) in torch_params["param"].items():
        w_pack = jnp.stack([w1, w2, wd]).astype(jnp.bfloat16)                   # [3, H, H]
        b_pack = jnp.stack([b1, b2, bd, jnp.zeros_like(bd)], axis=1)            # [H, 4]
        packs[kw] = (w_pack, b_pack.astype(jnp.float32))
    wa, ba = torch_params["attention"]
    attention = (wa[:, :H].astype(jnp.bfloat16),       # waf: [1, H]
                 wa[0, H:].astype(jnp.float32),        # wak: [H]
                 ba.reshape(()).astype(jnp.float32))   # ba : scalar
    return {"packs": packs, "attention": attention}


# ---------------------------------------------------------------------------
# Pure-JAX reference (torch-layout f32 weights)
# ---------------------------------------------------------------------------
def ref_forward(feat, keyword, torch_params, hidden):
    def mlp2(x, layers):
        for (w, b) in layers:
            x = jnp.maximum(x @ w.T + b, 0.0)
        return x

    wa, ba = torch_params["attention"]
    wd, bd = torch_params["dense"]
    if isinstance(keyword, str):
        agg = mlp2(feat, torch_params["param"][keyword])
    else:
        h = mlp2(feat, torch_params["param"]["representation"])
        kw_exp = jnp.broadcast_to(keyword[None, :], (feat.shape[0], hidden))
        fk = jnp.concatenate([h, kw_exp], axis=1)
        score = jax.nn.sigmoid(fk @ wa.T + ba)
        agg = score * h
    return jnp.maximum(agg @ wd.T + bd, 0.0)


# ---------------------------------------------------------------------------
if __name__ == "__main__":
    H = HIDDEN
    key = jax.random.PRNGKey(0)
    keys = jax.random.split(key, 16)
    kit = iter(keys)

    def linear_params(k, in_dim, out_dim, scale=0.1):
        kw_, kb_ = jax.random.split(k)
        w = jax.random.normal(kw_, (out_dim, in_dim), jnp.float32) * scale  # torch layout
        b = jax.random.normal(kb_, (out_dim,), jnp.float32) * scale
        return w, b

    torch_params = {
        "param": {
            kw: (linear_params(next(kit), H, H), linear_params(next(kit), H, H))
            for kw in ("representation", "relations", "actions")
        },
        "attention": linear_params(next(kit), 2 * H, 1),
        "dense": linear_params(next(kit), H, H),
    }
    params = prepare_params(torch_params, H)   # transposition-free packing hoisted out of the hot path

    feat_small = jax.random.normal(next(kit), (NUM_FRAMES, H), jnp.float32)
    kw_vec = jax.random.normal(next(kit), (H,), jnp.float32)
    feat_big = jax.random.normal(next(kit), (NUM_FRAMES_BIG, H), jnp.float32)

    out_tensor = filter_frame_forward(feat_small, kw_vec, params)        # gridless path
    out_string = filter_frame_forward(feat_small, "actions", params)     # gridless path
    out_big_t = filter_frame_forward(feat_big, kw_vec, params)           # tiled grid + padded tail
    out_big_s = filter_frame_forward(feat_big, "relations", params)      # tiled grid, keyword path
    jax.block_until_ready((out_tensor, out_string, out_big_t, out_big_s))

    assert out_tensor.shape == (NUM_FRAMES, H)
    assert out_string.shape == (NUM_FRAMES, H)
    assert out_big_t.shape == (NUM_FRAMES_BIG, H)
    assert out_big_s.shape == (NUM_FRAMES_BIG, H)

    ref_tensor = ref_forward(feat_small, kw_vec, torch_params, H)
    ref_string = ref_forward(feat_small, "actions", torch_params, H)
    ref_big_t = ref_forward(feat_big, kw_vec, torch_params, H)
    ref_big_s = ref_forward(feat_big, "relations", torch_params, H)

    assert jnp.allclose(out_tensor, ref_tensor, atol=2e-2, rtol=2e-2)
    assert jnp.allclose(out_string, ref_string, atol=2e-2, rtol=2e-2)
    assert jnp.allclose(out_big_t, ref_big_t, atol=2e-2, rtol=2e-2)
    assert jnp.allclose(out_big_s, ref_big_s, atol=2e-2, rtol=2e-2)

    print("KERNEL_OK")
</pallas_src>

<mosaic_0001>
module attributes {stable_mosaic.version = 11 : i64} {
  func.func @_tensor_path_kernel(%arg0: memref<1x1xf32, #tpu.memory_space<smem>>, %arg1: memref<32x128xf32, #tpu.memory_space<vmem>>, %arg2: memref<3x32x32xbf16, #tpu.memory_space<vmem>>, %arg3: memref<32x4xf32, #tpu.memory_space<vmem>>, %arg4: memref<1x32xbf16, #tpu.memory_space<vmem>>, %arg5: memref<32x128xf32, #tpu.memory_space<vmem>>) attributes {dimension_semantics = [], scalar_prefetch = 0 : i64, scratch_operands = 0 : i64, tpu.core_type = #tpu.core_type<tc>} {
    %c0 = arith.constant 0 : index
    %c0_0 = arith.constant 0 : index
    %0 = vector.load %arg1[%c0, %c0_0] : memref<32x128xf32, #tpu.memory_space<vmem>>, vector<32x128xf32>
    %1 = arith.truncf %0 : vector<32x128xf32> to vector<32x128xbf16>
    %c0_1 = arith.constant 0 : index
    %c0_2 = arith.constant 0 : index
    %c0_3 = arith.constant 0 : index
    %2 = vector.load %arg2[%c0_1, %c0_2, %c0_3] : memref<3x32x32xbf16, #tpu.memory_space<vmem>>, vector<1x32x32xbf16>
    %3 = vector.shape_cast %2 : vector<1x32x32xbf16> to vector<32x32xbf16>
    %cst = arith.constant dense<0.000000e+00> : vector<32x128xf32>
    %4 = tpu.matmul %3, %1, %cst {dimension_numbers = #tpu.dot_dimension_numbers<[1], [0], [0], [1], [0, 0, 1, 1], [], []>} : vector<32x32xbf16>, vector<32x128xbf16>, vector<32x128xf32> -> vector<32x128xf32>
    %c0_4 = arith.constant 0 : index
    %c0_5 = arith.constant 0 : index
    %5 = vector.load %arg3[%c0_4, %c0_5] : memref<32x4xf32, #tpu.memory_space<vmem>>, vector<32x1xf32>
    %6 = vector.broadcast %5 : vector<32x1xf32> to vector<32x128xf32>
    %7 = arith.addf %4, %6 : vector<32x128xf32>
    %cst_6 = arith.constant 0.000000e+00 : f32
    %8 = vector.broadcast %cst_6 : f32 to vector<32x128xf32>
    %9 = arith.maximumf %7, %8 : vector<32x128xf32>
    %c1 = arith.constant 1 : index
    %c0_7 = arith.constant 0 : index
    %c0_8 = arith.constant 0 : index
    %10 = vector.load %arg2[%c1, %c0_7, %c0_8] : memref<3x32x32xbf16, #tpu.memory_space<vmem>>, vector<1x32x32xbf16>
    %11 = vector.shape_cast %10 : vector<1x32x32xbf16> to vector<32x32xbf16>
    %12 = arith.truncf %9 : vector<32x128xf32> to vector<32x128xbf16>
    %cst_9 = arith.constant dense<0.000000e+00> : vector<32x128xf32>
    %13 = tpu.matmul %11, %12, %cst_9 {dimension_numbers = #tpu.dot_dimension_numbers<[1], [0], [0], [1], [0, 0, 1, 1], [], []>} : vector<32x32xbf16>, vector<32x128xbf16>, vector<32x128xf32> -> vector<32x128xf32>
    %c0_10 = arith.constant 0 : index
    %c1_11 = arith.constant 1 : index
    %14 = vector.load %arg3[%c0_10, %c1_11] : memref<32x4xf32, #tpu.memory_space<vmem>>, vector<32x1xf32>
    %15 = vector.broadcast %14 : vector<32x1xf32> to vector<32x128xf32>
    %16 = arith.addf %13, %15 : vector<32x128xf32>
    %cst_12 = arith.constant 0.000000e+00 : f32
    %17 = vector.broadcast %cst_12 : f32 to vector<32x128xf32>
    %18 = arith.maximumf %16, %17 : vector<32x128xf32>
    %19 = arith.truncf %18 : vector<32x128xf32> to vector<32x128xbf16>
    %c0_13 = arith.constant 0 : index
    %c0_14 = arith.constant 0 : index
    %20 = vector.load %arg4[%c0_13, %c0_14] : memref<1x32xbf16, #tpu.memory_space<vmem>>, vector<1x32xbf16>
    %cst_15 = arith.constant dense<0.000000e+00> : vector<1x128xf32>
    %21 = tpu.matmul %20, %19, %cst_15 {dimension_numbers = #tpu.dot_dimension_numbers<[1], [0], [0], [1], [0, 0, 1, 1], [], []>} : vector<1x32xbf16>, vector<32x128xbf16>, vector<1x128xf32> -> vector<1x128xf32>
    %c0_16 = arith.constant 0 : index
    %c0_17 = arith.constant 0 : index
    %22 = memref.load %arg0[%c0_16, %c0_17] : memref<1x1xf32, #tpu.memory_space<smem>>
    %23 = vector.broadcast %22 : f32 to vector<1x128xf32>
    %24 = arith.addf %21, %23 : vector<1x128xf32>
    %25 = arith.negf %24 : vector<1x128xf32>
    %26 = math.exp %25 : vector<1x128xf32>
    %cst_18 = arith.constant 1.000000e+00 : f32
    %27 = vector.broadcast %cst_18 : f32 to vector<1x128xf32>
    %28 = arith.addf %27, %26 : vector<1x128xf32>
    %29 = arith.divf %27, %28 : vector<1x128xf32>
    %30 = vector.broadcast %29 : vector<1x128xf32> to vector<32x128xf32>
    %31 = arith.mulf %30, %18 : vector<32x128xf32>
    %32 = arith.truncf %31 : vector<32x128xf32> to vector<32x128xbf16>
    %c2 = arith.constant 2 : index
    %c0_19 = arith.constant 0 : index
    %c0_20 = arith.constant 0 : index
    %33 = vector.load %arg2[%c2, %c0_19, %c0_20] : memref<3x32x32xbf16, #tpu.memory_space<vmem>>, vector<1x32x32xbf16>
    %34 = vector.shape_cast %33 : vector<1x32x32xbf16> to vector<32x32xbf16>
    %cst_21 = arith.constant dense<0.000000e+00> : vector<32x128xf32>
    %35 = tpu.matmul %34, %32, %cst_21 {dimension_numbers = #tpu.dot_dimension_numbers<[1], [0], [0], [1], [0, 0, 1, 1], [], []>} : vector<32x32xbf16>, vector<32x128xbf16>, vector<32x128xf32> -> vector<32x128xf32>
    %c0_22 = arith.constant 0 : index
    %c2_23 = arith.constant 2 : index
    %36 = vector.load %arg3[%c0_22, %c2_23] : memref<32x4xf32, #tpu.memory_space<vmem>>, vector<32x1xf32>
    %37 = vector.broadcast %36 : vector<32x1xf32> to vector<32x128xf32>
    %38 = arith.addf %35, %37 : vector<32x128xf32>
    %cst_24 = arith.constant 0.000000e+00 : f32
    %39 = vector.broadcast %cst_24 : f32 to vector<32x128xf32>
    %40 = arith.maximumf %38, %39 : vector<32x128xf32>
    %c0_25 = arith.constant 0 : index
    %c0_26 = arith.constant 0 : index
    %41 = vector.load %arg5[%c0_25, %c0_26] : memref<32x128xf32, #tpu.memory_space<vmem>>, vector<32x128xf32>
    tpu.vector_store %arg5[%c0_25, %c0_26], %40 {strides = array<i32>} : memref<32x128xf32, #tpu.memory_space<vmem>>, vector<32x128xf32>,
    return
  }
}

</mosaic_0001>

<llo_original>
// kernel: tpu_custom_call.1
$region0: #{tpu_custom_call.1}
  #allocation0 [shape = 'u32[]', space=smem, size = 0x4, offset = 0x4, fixed_abs, tag = 'smem constant byte address 0x4 - core index']
  #allocation1 [shape = 'u32[72,128]{1,0:T(1,128)}', space=vmem, size = 0x9000, scoped, tag = 'internal scratch']
  #allocation2 [shape = 'f32[1,1]{1,0:T(1,128)S(6)}', space=smem, size = 0x200, scoped, tag = 'scoped memory for tpu_custom_call.1']
  %s0 = inlined_call_operand.<no memory space> [shape: f32[1,1], index: 0, kind: input, shape index: {}]
  %s1 = inlined_call_operand.vmem [shape: f32[32,128], index: 1, kind: input, shape index: {}]
  %s2 = inlined_call_operand.hbm [shape: bf16[3,32,32], index: 2, kind: input, shape index: {}]
  %s3 = inlined_call_operand.vmem [shape: f32[32,4], index: 3, kind: input, shape index: {}]
  %s4 = inlined_call_operand.vmem [shape: bf16[1,32], index: 4, kind: input, shape index: {}]
  %s5 = inlined_call_operand.hbm [shape: f32[32,128], index: 5, kind: output, shape index: {}]
  %s6 = sld [smem:[#allocation0]]
  $region34: #{tpu_custom_call.1} parent=0
    _
  %s8 = ssub.s32 1, %s6
  %s9 = scalar_select 0, %s8, %s6
  %10 = sst [smem:[#allocation2]] %s0
  $region1: #{tpu_custom_call.1} parent=0
    #allocation3 [shape = 'u8[24576]{0}', space=vmem, size = 0x6000, scoped, tag = 'input window, operand 2, single buffered']
    #allocation4 [shape = 's32[1]{0}', space=sflag, size = 0x4, scoped, tag = 'scoped memory for tpu_custom_call.1']
    #allocation5 [shape = 's32[1]{0}', space=sflag, size = 0x4, scoped, tag = 'scoped memory for tpu_custom_call.1']
    #allocation6 [shape = 'u8[16384]{0}', space=vmem, size = 0x4000, scoped, tag = 'output window, operand 0, single buffered']
    %11 = vsyncpa [#allocation4], 0
    %12 = vsyncpa [#allocation5], 0
    // Predicated region
    $region2: #{tpu_custom_call.1} parent=1 // pred_check
      _
    $region3: #{tpu_custom_call.1} parent=1 // pred_check_branch
      %14 = sbr.rel (0) target = $region5
    $region4: #{tpu_custom_call.1} parent=1 // pred_region
      _
    $region5: #{tpu_custom_call.1} parent=1 // pred_fallthru
      _
    // Predicated region
    $region6: #{tpu_custom_call.1} parent=1 // pred_check
      _
    $region7: #{tpu_custom_call.1} parent=1 // pred_check_branch
      %16 = sbr.rel (0) target = $region9
    $region8: #{tpu_custom_call.1} parent=1 // pred_region
      _
    $region9: #{tpu_custom_call.1} parent=1 // pred_fallthru
      _
    // Predicated region
    $region10: #{tpu_custom_call.1} parent=1 // pred_check
      _
    $region11: #{tpu_custom_call.1} parent=1 // pred_check_branch
      %18 = sbr.rel (0) target = $region13
    $region12: #{tpu_custom_call.1} parent=1 // pred_region
      %20 = vsyncadd [#allocation4], 0
      %s21 = sshll.u32 %s2, 4
      %s22 = int_to_ptr.hbm [resolvable:$true] %s21
      %s23 = sshll.u32 [#allocation3], 4
      %s24 = int_to_ptr.vmem [resolvable:$true] %s23
      %29 = dma.hbm_to_vmem [thread:$0]  %s22, 768, %s24, [#allocation4], 64, 64, 4
    $region13: #{tpu_custom_call.1} parent=1 // pred_fallthru
      _
    // Predicated region
    $region14: #{tpu_custom_call.1} parent=1 // pred_check
      _
    $region15: #{tpu_custom_call.1} parent=1 // pred_check_branch
      %31 = sbr.rel (0) target = $region17
    $region16: #{tpu_custom_call.1} parent=1 // pred_region
      _
    $region17: #{tpu_custom_call.1} parent=1 // pred_fallthru
      _
    // Predicated region
    $region18: #{tpu_custom_call.1} parent=1 // pred_check
      _
    $region19: #{tpu_custom_call.1} parent=1 // pred_check_branch
      %33 = sbr.rel (0) target = $region21
    $region20: #{tpu_custom_call.1} parent=1 // pred_region
      _
    $region21: #{tpu_custom_call.1} parent=1 // pred_fallthru
      _
    // Predicated region
    $region22: #{tpu_custom_call.1} parent=1 // pred_check
      _
    $region23: #{tpu_custom_call.1} parent=1 // pred_check_branch
      %35 = sbr.rel (0) target = $region25
    $region24: #{tpu_custom_call.1} parent=1 // pred_region
      %37 = dma.done [#allocation4], 768
    $region25: #{tpu_custom_call.1} parent=1 // pred_fallthru
      _
    %v39 = vld [vmem:[%s1] sm:$0xff]
    %v40 = vld [vmem:[%s1 + $0x8] sm:$0xff]
    %v41 = vld [vmem:[%s1 + $0x10] sm:$0xff]
    %v42 = vld [vmem:[%s1 + $0x18] sm:$0xff]
    %v43 = vpack.c.bf16 %v40, %v39
    %v44 = vpack.c.bf16 %v42, %v41
    %v45 = vld [vmem:[#allocation3] sm:$0xf]
    %v46 = vld [vmem:[#allocation3 + $0x4] sm:$0xf]
    %v47 = vld [vmem:[#allocation3 + $0x8] sm:$0xf]
    %v48 = vld [vmem:[#allocation3 + $0xc] sm:$0xf]
    %v49 = vld [vmem:[%s3] sm:$0xff]
    %v50 = vld [vmem:[%s3 + $0x8] sm:$0xff]
    %v51 = vld [vmem:[%s3 + $0x10] sm:$0xff]
    %v52 = vld [vmem:[%s3 + $0x18] sm:$0xff]
    %54 = vset.pattern.permute.xlu0 0
    %55 = vperm.xlu0 %54, %v49
    %v56 = vpop.permute.xlu0 %55
    %59 = vset.pattern.permute.xlu0 0
    %60 = vperm.xlu0 %59, %v50
    %v61 = vpop.permute.xlu0 %60
    %64 = vset.pattern.permute.xlu0 0
    %65 = vperm.xlu0 %64, %v51
    %v66 = vpop.permute.xlu0 %65
    %69 = vset.pattern.permute.xlu0 0
    %70 = vperm.xlu0 %69, %v52
    %v71 = vpop.permute.xlu0 %70
    %v77 = vunpack.c.l.b16 %v45
    %v78 = vunpack.c.l.b16 %v46
    %v79 = vunpack.c.l.b16 %v47
    %v80 = vunpack.c.l.b16 %v48
    %v81 = vpack.c.b16 %v78, %v77
    %v82 = vpack.c.b16 %v80, %v79
    %vm83 = vcmask 261120
    %v85 = vsel %vm83, %v81, 0
    %v88 = vsel %vm83, %v82, 0
    %90 = vmatpush.bf16.msra.mxu0 0
    %91 = vmatpush.bf16.msra.mxu0 0
    %92 = vmatpush.bf16.msra.mxu0 0
    %93 = vmatpush.bf16.msra.mxu0 0
    %94 = vmatpush.bf16.msra.mxu0 0
    %95 = vmatpush.bf16.msra.mxu0 0
    %96 = vmatpush.bf16.msra.mxu0 %v44
    %97 = vmatpush.bf16.msra.mxu0 %v43
    %98 = vmatmul.bf16.gmra.mxu0 %v85
    %v99 = vpop.f32.mrf.mxu0
    %v100 = vadd.f32 %v56, %v99
    %v101 = vpop.f32.mrf.mxu0
    %v102 = vadd.f32 %v61, %v101
    %103 = vmatmul.bf16.gmra.mxu0 %v88
    %v104 = vpop.f32.mrf.mxu0
    %v105 = vadd.f32 %v66, %v104
    %v106 = vpop.f32.mrf.mxu0
    %v107 = vadd.f32 %v71, %v106
    %108 = vdwg.mxu0
    %v109 = vmax.f32 %v100, 0.0
    %v110 = vmax.f32 %v102, 0.0
    %v111 = vmax.f32 %v105, 0.0
    %v112 = vmax.f32 %v107, 0.0
    %s113 = scalar_lea.vmem [#allocation3], 16
    %v114 = vld [vmem:[%s113] sm:$0xf]
    %v115 = vld [vmem:[%s113 + $0x4] sm:$0xf]
    %v116 = vld [vmem:[%s113 + $0x8] sm:$0xf]
    %v117 = vld [vmem:[%s113 + $0xc] sm:$0xf]
    %v118 = vpack.c.bf16 %v110, %v109
    %v119 = vpack.c.bf16 %v112, %v111
    %120 = vset.pattern.permute.xlu0 1
    %121 = vperm.xlu0 %120, %v49
    %v122 = vpop.permute.xlu0 %121
    %124 = vset.pattern.permute.xlu0 1
    %125 = vperm.xlu0 %124, %v50
    %v126 = vpop.permute.xlu0 %125
    %128 = vset.pattern.permute.xlu0 1
    %129 = vperm.xlu0 %128, %v51
    %v130 = vpop.permute.xlu0 %129
    %132 = vset.pattern.permute.xlu0 1
    %133 = vperm.xlu0 %132, %v52
    %v134 = vpop.permute.xlu0 %133
    %v140 = vunpack.c.l.b16 %v114
    %v141 = vunpack.c.l.b16 %v115
    %v142 = vunpack.c.l.b16 %v116
    %v143 = vunpack.c.l.b16 %v117
    %v144 = vpack.c.b16 %v141, %v140
    %v145 = vpack.c.b16 %v143, %v142
    %v147 = vsel %vm83, %v144, 0
    %v150 = vsel %vm83, %v145, 0
    %152 = vmatpush.bf16.msra.mxu0 0
    %153 = vmatpush.bf16.msra.mxu0 0
    %154 = vmatpush.bf16.msra.mxu0 0
    %155 = vmatpush.bf16.msra.mxu0 0
    %156 = vmatpush.bf16.msra.mxu0 0
    %157 = vmatpush.bf16.msra.mxu0 0
    %158 = vmatpush.bf16.msra.mxu0 %v119
    %159 = vmatpush.bf16.msra.mxu0 %v118
    %160 = vmatmul.bf16.gmra.mxu0 %v147
    %v161 = vpop.f32.mrf.mxu0
    %v162 = vadd.f32 %v122, %v161
    %v163 = vpop.f32.mrf.mxu0
    %v164 = vadd.f32 %v126, %v163
    %165 = vmatmul.bf16.gmra.mxu0 %v150
    %v166 = vpop.f32.mrf.mxu0
    %v167 = vadd.f32 %v130, %v166
    %v168 = vpop.f32.mrf.mxu0
    %v169 = vadd.f32 %v134, %v168
    %170 = vdwg.mxu0
    %v171 = vmax.f32 %v162, 0.0
    %v172 = vmax.f32 %v164, 0.0
    %v173 = vmax.f32 %v167, 0.0
    %v174 = vmax.f32 %v169, 0.0
    %v175 = vpack.c.bf16 %v172, %v171
    %v176 = vpack.c.bf16 %v174, %v173
    %v177 = vld [vmem:[%s4] sm:$0x1]
    %s178 = sld [smem:[#allocation2]]
    %v179 = vstv %s178
    %v181 = vsel %vm83, %v177, 0
    %183 = vmatpush.bf16.msra.mxu0 0
    %184 = vmatpush.bf16.msra.mxu0 0
    %185 = vmatpush.bf16.msra.mxu0 0
    %186 = vmatpush.bf16.msra.mxu0 0
    %187 = vmatpush.bf16.msra.mxu0 0
    %188 = vmatpush.bf16.msra.mxu0 0
    %189 = vmatpush.bf16.msra.mxu0 %v176
    %190 = vmatpush.bf16.msra.mxu0 %v175
    %191 = vmatmul.bf16.gmra.mxu0 %v181
    %v192 = vpop.f32.mrf.mxu0
    %v193 = vadd.f32 %v179, %v192
    %v194 = vpop.f32.mrf.mxu0
    %195 = vdwg.mxu0
    %v196 = vxor.u32 %v193, 2147483648
    %v197 = vmul.f32 %v196, 1.442695
    %v198 = vpow.pop %v197
    %v199 = vadd.f32 %v198, 1.0
    %v200 = vrcp.pop %v199
    %v201 = vmul.f32 %v199, %v200
    %v202 = vsub.f32 1.0, %v201
    %v203 = vmul.f32 %v200, %v202
    %v204 = vadd.f32 %v200, %v203
    %vm205 = vweird.f32 %v199
    %vm206 = vweird.f32 %v200
    %vm207 = vmor %vm205, %vm206
    %v208 = vsel %vm207, %v200, %v204
    %v209 = vand.u32 2147483647, %v199
    %vm210 = vcmp.eq.f32.partialorder %v209, 8.507059e+37
    %v211 = vand.u32 %v199, 2147483648
    %v212 = vor.u32 1.1754944e-38, %v211
    %v213 = vsel %vm210, %v212, %v208
    %v214 = vmul.f32 1.0, %v213
    %v215 = vperm.slane %v214, 0
    %v216 = vmul.f32 %v215, %v171
    %v217 = vmul.f32 %v215, %v172
    %v218 = vmul.f32 %v215, %v173
    %v219 = vmul.f32 %v215, %v174
    %v220 = vpack.c.bf16 %v217, %v216
    %v221 = vpack.c.bf16 %v219, %v218
    %s222 = scalar_lea.vmem [#allocation3], 32
    %v223 = vld [vmem:[%s222] sm:$0xf]
    %v224 = vld [vmem:[%s222 + $0x4] sm:$0xf]
    %v225 = vld [vmem:[%s222 + $0x8] sm:$0xf]
    %v226 = vld [vmem:[%s222 + $0xc] sm:$0xf]
    %227 = vset.pattern.permute.xlu0 2
    %228 = vperm.xlu0 %227, %v49
    %v229 = vpop.permute.xlu0 %228
    %231 = vset.pattern.permute.xlu0 2
    %232 = vperm.xlu0 %231, %v50
    %v233 = vpop.permute.xlu0 %232
    %235 = vset.pattern.permute.xlu0 2
    %236 = vperm.xlu0 %235, %v51
    %v237 = vpop.permute.xlu0 %236
    %239 = vset.pattern.permute.xlu0 2
    %240 = vperm.xlu0 %239, %v52
    %v241 = vpop.permute.xlu0 %240
    %v247 = vunpack.c.l.b16 %v223
    %v248 = vunpack.c.l.b16 %v224
    %v249 = vunpack.c.l.b16 %v225
    %v250 = vunpack.c.l.b16 %v226
    %v251 = vpack.c.b16 %v248, %v247
    %v252 = vpack.c.b16 %v250, %v249
    %v254 = vsel %vm83, %v251, 0
    %v257 = vsel %vm83, %v252, 0
    %259 = vmatpush.bf16.msra.mxu0 0
    %260 = vmatpush.bf16.msra.mxu0 0
    %261 = vmatpush.bf16.msra.mxu0 0
    %262 = vmatpush.bf16.msra.mxu0 0
    %263 = vmatpush.bf16.msra.mxu0 0
    %264 = vmatpush.bf16.msra.mxu0 0
    %265 = vmatpush.bf16.msra.mxu0 %v221
    %266 = vmatpush.bf16.msra.mxu0 %v220
    %267 = vmatmul.bf16.gmra.mxu0 %v254
    %v268 = vpop.f32.mrf.mxu0
    %v269 = vadd.f32 %v229, %v268
    %v270 = vpop.f32.mrf.mxu0
    %v271 = vadd.f32 %v233, %v270
    %272 = vmatmul.bf16.gmra.mxu0 %v257
    %v273 = vpop.f32.mrf.mxu0
    %v274 = vadd.f32 %v237, %v273
    %v275 = vpop.f32.mrf.mxu0
    %v276 = vadd.f32 %v241, %v275
    %277 = vdwg.mxu0
    %v278 = vmax.f32 %v269, 0.0
    %v279 = vmax.f32 %v271, 0.0
    %v280 = vmax.f32 %v274, 0.0
    %v281 = vmax.f32 %v276, 0.0
    %282 = vst [vmem:[#allocation6] sm:$0xff] %v278
    %283 = vst [vmem:[#allocation6 + $0x8] sm:$0xff] %v279
    %284 = vst [vmem:[#allocation6 + $0x10] sm:$0xff] %v280
    %285 = vst [vmem:[#allocation6 + $0x18] sm:$0xff] %v281
    // Predicated region
    $region26: #{tpu_custom_call.1} parent=1 // pred_check
      _
    $region27: #{tpu_custom_call.1} parent=1 // pred_check_branch
      %287 = sbr.rel (0) target = $region29
    $region28: #{tpu_custom_call.1} parent=1 // pred_region
      %289 = vsyncadd [#allocation5], 0
      %s290 = sshll.u32 [#allocation6], 4
      %s291 = int_to_ptr.vmem [resolvable:$true] %s290
      %s292 = sshll.u32 %s5, 4
      %s293 = int_to_ptr.hbm [resolvable:$true] %s292
      %298 = dma.vmem_to_hbm [thread:$0]  %s291, 512, %s293, [#allocation5], 128, 128, 8
    $region29: #{tpu_custom_call.1} parent=1 // pred_fallthru
      _
    // Predicated region
    $region30: #{tpu_custom_call.1} parent=1 // pred_check
      _
    $region31: #{tpu_custom_call.1} parent=1 // pred_check_branch
      %300 = sbr.rel (0) target = $region33
    $region32: #{tpu_custom_call.1} parent=1 // pred_region
      %302 = dma.done [#allocation5], 512
    $region33: #{tpu_custom_call.1} parent=1 // pred_fallthru
      _
    %303 = vsyncpa [#allocation4], 1
    %304 = vsyncpa [#allocation5], 1

</llo_original>
